<compile_context>
chip_gen: v5e
topology: v5e:2x2
jax: 0.10.0
libtpu: 0.0.40
codegen_flags: <defaults>
</compile_context>

<pallas_src>
import numpy as np
import jax
import jax.numpy as jnp
from jax.experimental import pallas as pl
from jax.experimental.pallas import tpu as pltpu

_HALO = 128  # lane-aligned halo width; must cover the K - factor cross-tile taps


def make_downsample_filter(factor, order):
    """Same deterministic construction as Downsample.__init__."""
    box = np.ones(factor)
    k = np.ones(factor)
    for _ in range(order):
        k = np.convolve(k, box)
    return (k / k.sum()).astype(np.float32)


def _round_up(x, m):
    return ((x + m - 1) // m) * m


def _downsample_kernel(x_ref, h_ref, wm_ref, wh_ref, o_ref):
    # x_ref : (TM, W)     main input window for this output tile
    # h_ref : (TM, HALO)  first HALO columns of the *next* window (halo taps)
    # wm_ref: (W, TN)     block-banded filter (constant across the grid)
    # wh_ref: (HALO, TN)  halo part of the band (constant across the grid)
    # o_ref : (TM, TN)
    acc = jnp.dot(x_ref[...], wm_ref[...], preferred_element_type=jnp.float32)
    acc = acc + jnp.dot(h_ref[...], wh_ref[...], preferred_element_type=jnp.float32)
    o_ref[...] = acc.astype(o_ref.dtype)


def downsample(x, channels, factor=2, order=2, *, block_rows=256, block_out=512,
               compute_dtype=jnp.bfloat16):
    """Equivalent of Downsample(channels, factor, order).forward(x); x is (B, C, L)."""
    assert factor > 1, "Downsampling factor must be > 1"
    total_padding = order * (factor - 1)
    assert total_padding % 2 == 0, "order*(factor-1) must be divisible by 2"
    assert block_out % 128 == 0 and block_rows % 8 == 0
    pad = total_padding // 2

    filt = make_downsample_filter(factor, order)
    K = filt.shape[0]
    assert K - factor <= _HALO, "filter support too large for the halo block"

    B, C, L = x.shape
    assert C == channels
    L_pad = L + 2 * pad
    L_out = (L_pad - K) // factor + 1

    rows = B * C
    TN = min(block_out, _round_up(L_out, 128))   # output-length tile (lane dense)
    TM = min(block_rows, _round_up(rows, 8))     # row tile (sublane aligned)
    W = TN * factor                              # input window per output tile
    n_len = _round_up(L_out, TN) // TN
    n_row = _round_up(rows, TM) // TM
    rows_pad = n_row * TM
    L_in_pad = n_len * W + _HALO

    # Single layout pass: flatten (B, C) -> rows, cast, and add the conv zero
    # padding plus tile-alignment / halo padding on the right.
    # TODO(synk): this padded copy of x could be removed entirely by handling
    # the edge halo in-kernel with element-offset BlockSpecs + masking.
    right_pad = L_in_pad - L - pad
    assert right_pad >= 0
    x_rows = x.reshape(rows, L).astype(compute_dtype)
    x_padded = jnp.pad(x_rows, ((0, rows_pad - rows), (pad, right_pad)))

    # Constant block-banded filter matrices (size depends only on the tile,
    # never on L):  out[:, o] = sum_k filt[k] * window[:, o*factor + k].
    wm_np = np.zeros((W, TN), dtype=np.float32)
    wh_np = np.zeros((_HALO, TN), dtype=np.float32)
    for o in range(TN):
        for k in range(K):
            p = o * factor + k
            if p < W:
                wm_np[p, o] = filt[k]
            else:
                wh_np[p - W, o] = filt[k]
    wm = jnp.asarray(wm_np, dtype=compute_dtype)
    wh = jnp.asarray(wh_np, dtype=compute_dtype)

    nb128 = W // 128  # number of 128-lane blocks in one main window

    out_padded = pl.pallas_call(
        _downsample_kernel,
        out_shape=jax.ShapeDtypeStruct((rows_pad, n_len * TN), x.dtype),
        grid=(n_row, n_len),
        in_specs=[
            pl.BlockSpec((TM, W), lambda i, j: (i, j)),
            pl.BlockSpec((TM, _HALO), lambda i, j: (i, (j + 1) * nb128)),
            pl.BlockSpec((W, TN), lambda i, j: (0, 0)),
            pl.BlockSpec((_HALO, TN), lambda i, j: (0, 0)),
        ],
        out_specs=pl.BlockSpec((TM, TN), lambda i, j: (i, j)),
        compiler_params=pltpu.CompilerParams(
            dimension_semantics=("parallel", "parallel")),
    )(x_padded, x_padded, wm, wh)

    return out_padded[:rows, :L_out].reshape(B, C, L_out)


def _reference(x, factor, order):
    """Plain numpy strided correlation == F.conv1d(groups=C) of the module."""
    filt = make_downsample_filter(factor, order)
    pad = (order * (factor - 1)) // 2
    K = filt.shape[0]
    B, C, L = x.shape
    L_out = (L + 2 * pad - K) // factor + 1
    xp = np.pad(np.asarray(x, dtype=np.float64), ((0, 0), (0, 0), (pad, pad)))
    ref = np.zeros((B, C, L_out), dtype=np.float64)
    for o in range(L_out):
        ref[..., o] = (xp[..., o * factor: o * factor + K] * filt).sum(-1)
    return ref.astype(np.float32)


if __name__ == "__main__":
    # Config 1: small shape consistent with the module's forward (B, C, L).
    B, C, L = 2, 4, 16
    x1 = jax.random.normal(jax.random.PRNGKey(0), (B, C, L), dtype=jnp.float32)
    y1 = jax.block_until_ready(downsample(x1, channels=C, factor=2, order=2))
    np.testing.assert_allclose(np.asarray(y1), _reference(x1, 2, 2),
                               rtol=5e-2, atol=3e-2)

    # Same config with f32 compute: exact check of the banded construction.
    y1f = jax.block_until_ready(
        downsample(x1, channels=C, factor=2, order=2, compute_dtype=jnp.float32))
    np.testing.assert_allclose(np.asarray(y1f), _reference(x1, 2, 2),
                               rtol=1e-5, atol=1e-5)

    # Config 2: multiple length tiles + multiple row tiles (exercises the halo
    # across tile boundaries and the row/length padding paths).
    B, C, L = 2, 5, 600
    x2 = jax.random.normal(jax.random.PRNGKey(0), (B, C, L), dtype=jnp.float32)
    y2 = jax.block_until_ready(
        downsample(x2, channels=C, factor=2, order=2, block_out=128, block_rows=8))
    np.testing.assert_allclose(np.asarray(y2), _reference(x2, 2, 2),
                               rtol=5e-2, atol=3e-2)

    # Config 3: different factor/order (factor=3, order=2 -> 7-tap filter).
    B, C, L = 2, 4, 40
    x3 = jax.random.normal(jax.random.PRNGKey(0), (B, C, L), dtype=jnp.float32)
    y3 = jax.block_until_ready(downsample(x3, channels=C, factor=3, order=2))
    np.testing.assert_allclose(np.asarray(y3), _reference(x3, 3, 2),
                               rtol=5e-2, atol=3e-2)

    print("KERNEL_OK")
</pallas_src>

<mosaic_0001>
module attributes {stable_mosaic.version = 11 : i64} {
  func.func @_downsample_kernel(%arg0: i32, %arg1: i32, %arg2: memref<8x256xbf16, #tpu.memory_space<vmem>>, %arg3: memref<8x128xbf16, #tpu.memory_space<vmem>>, %arg4: memref<256x128xbf16, #tpu.memory_space<vmem>>, %arg5: memref<128x128xbf16, #tpu.memory_space<vmem>>, %arg6: memref<8x128xf32, #tpu.memory_space<vmem>>) attributes {dimension_semantics = [#tpu.dimension_semantics<parallel>, #tpu.dimension_semantics<parallel>], iteration_bounds = array<i64: 1, 1>, scalar_prefetch = 0 : i64, scratch_operands = 0 : i64, tpu.core_type = #tpu.core_type<tc>, window_params = [{transform_indices = @transform_0, window_bounds = array<i64: 8, 256>}, {transform_indices = @transform_1, window_bounds = array<i64: 8, 128>}, {pipeline_mode = #tpu.pipeline_mode<synchronous>, transform_indices = @transform_2, window_bounds = array<i64: 256, 128>}, {pipeline_mode = #tpu.pipeline_mode<synchronous>, transform_indices = @transform_3, window_bounds = array<i64: 128, 128>}, {transform_indices = @transform_4, window_bounds = array<i64: 8, 128>}]} {
    %c0 = arith.constant 0 : index
    %c0_0 = arith.constant 0 : index
    %0 = vector.load %arg2[%c0, %c0_0] : memref<8x256xbf16, #tpu.memory_space<vmem>>, vector<8x256xbf16>
    %c0_1 = arith.constant 0 : index
    %c0_2 = arith.constant 0 : index
    %1 = vector.load %arg4[%c0_1, %c0_2] : memref<256x128xbf16, #tpu.memory_space<vmem>>, vector<256x128xbf16>
    %cst = arith.constant dense<0.000000e+00> : vector<8x128xf32>
    %2 = tpu.matmul %0, %1, %cst {dimension_numbers = #tpu.dot_dimension_numbers<[1], [0], [0], [1], [0, 0, 1, 1], [], []>} : vector<8x256xbf16>, vector<256x128xbf16>, vector<8x128xf32> -> vector<8x128xf32>
    %c0_3 = arith.constant 0 : index
    %c0_4 = arith.constant 0 : index
    %3 = vector.load %arg3[%c0_3, %c0_4] : memref<8x128xbf16, #tpu.memory_space<vmem>>, vector<8x128xbf16>
    %c0_5 = arith.constant 0 : index
    %c0_6 = arith.constant 0 : index
    %4 = vector.load %arg5[%c0_5, %c0_6] : memref<128x128xbf16, #tpu.memory_space<vmem>>, vector<128x128xbf16>
    %cst_7 = arith.constant dense<0.000000e+00> : vector<8x128xf32>
    %5 = tpu.matmul %3, %4, %cst_7 {dimension_numbers = #tpu.dot_dimension_numbers<[1], [0], [0], [1], [0, 0, 1, 1], [], []>} : vector<8x128xbf16>, vector<128x128xbf16>, vector<8x128xf32> -> vector<8x128xf32>
    %6 = arith.addf %2, %5 : vector<8x128xf32>
    %c0_8 = arith.constant 0 : index
    %c0_9 = arith.constant 0 : index
    %7 = vector.load %arg6[%c0_8, %c0_9] : memref<8x128xf32, #tpu.memory_space<vmem>>, vector<8x128xf32>
    tpu.vector_store %arg6[%c0_8, %c0_9], %6 {strides = array<i32>} : memref<8x128xf32, #tpu.memory_space<vmem>>, vector<8x128xf32>,
    return
  }
  func.func @transform_0(%arg0: i32, %arg1: i32) -> (i32, i32) {
    %c0_i32 = arith.constant 0 : i32
    return %arg0, %arg1 : i32, i32
  }
  func.func @transform_1(%arg0: i32, %arg1: i32) -> (i32, i32) {
    %c1_i32 = arith.constant 1 : i32
    %0 = arith.addi %arg1, %c1_i32 : i32
    %c2_i32 = arith.constant 2 : i32
    %1 = arith.muli %0, %c2_i32 : i32
    %c0_i32 = arith.constant 0 : i32
    return %arg0, %1 : i32, i32
  }
  func.func @transform_2(%arg0: i32, %arg1: i32) -> (i32, i32) {
    %c0_i32 = arith.constant 0 : i32
    %c0_i32_0 = arith.constant 0 : i32
    %c0_i32_1 = arith.constant 0 : i32
    return %c0_i32, %c0_i32_0 : i32, i32
  }
  func.func @transform_3(%arg0: i32, %arg1: i32) -> (i32, i32) {
    %c0_i32 = arith.constant 0 : i32
    %c0_i32_0 = arith.constant 0 : i32
    %c0_i32_1 = arith.constant 0 : i32
    return %c0_i32, %c0_i32_0 : i32, i32
  }
  func.func @transform_4(%arg0: i32, %arg1: i32) -> (i32, i32) {
    %c0_i32 = arith.constant 0 : i32
    return %arg0, %arg1 : i32, i32
  }
}

</mosaic_0001>

<llo_original>
// kernel: tpu_custom_call.1
$region0: #{tpu_custom_call.1}
  #allocation0 [shape = 'u32[]', space=smem, size = 0x4, offset = 0x4, fixed_abs, tag = 'smem constant byte address 0x4 - core index']
  #allocation1 [shape = 'u32[72,128]{1,0:T(1,128)}', space=vmem, size = 0x9000, scoped, tag = 'internal scratch']
  %s0 = inlined_call_operand.hbm [shape: bf16[8,384], index: 0, kind: input, shape index: {}]
  %s1 = inlined_call_operand.hbm [shape: bf16[8,384], index: 1, kind: input, shape index: {}]
  %s2 = inlined_call_operand.hbm [shape: bf16[256,128], index: 2, kind: input, shape index: {}]
  %s3 = inlined_call_operand.hbm [shape: bf16[128,128], index: 3, kind: input, shape index: {}]
  %s4 = inlined_call_operand.hbm [shape: f32[8,128], index: 4, kind: output, shape index: {}]
  %s5 = sld [smem:[#allocation0]]
  $region42: #{tpu_custom_call.1} parent=0
    _
  %s7 = ssub.s32 1, %s5
  %s8 = scalar_select 0, %s7, %s5
  $region1: #{tpu_custom_call.1} parent=0
    #allocation2 [shape = 'u8[4096]{0}', space=vmem, size = 0x1000, scoped, tag = 'input window, operand 0, single buffered']
    #allocation3 [shape = 's32[1]{0}', space=sflag, size = 0x4, scoped, tag = 'scoped memory for tpu_custom_call.1']
    #allocation4 [shape = 's32[1]{0}', space=sflag, size = 0x4, scoped, tag = 'scoped memory for tpu_custom_call.1']
    #allocation5 [shape = 'u8[2048]{0}', space=vmem, size = 0x800, scoped, tag = 'input window, operand 1, single buffered']
    #allocation6 [shape = 's32[1]{0}', space=sflag, size = 0x4, scoped, tag = 'scoped memory for tpu_custom_call.1']
    #allocation7 [shape = 'u8[65536]{0}', space=vmem, size = 0x10000, scoped, tag = 'input window, operand 2, single buffered']
    #allocation8 [shape = 'u8[32768]{0}', space=vmem, size = 0x8000, scoped, tag = 'input window, operand 3, single buffered']
    #allocation9 [shape = 's32[1]{0}', space=sflag, size = 0x4, scoped, tag = 'scoped memory for tpu_custom_call.1']
    #allocation10 [shape = 'u8[4096]{0}', space=vmem, size = 0x1000, scoped, tag = 'output window, operand 0, single buffered']
    %9 = vsyncpa [#allocation3], 0
    %10 = vsyncpa [#allocation6], 0
    %11 = vsyncpa [#allocation9], 0
    %12 = vsyncpa [#allocation4], 0
    // Predicated region
    $region2: #{tpu_custom_call.1} parent=1 // pred_check
      _
    $region3: #{tpu_custom_call.1} parent=1 // pred_check_branch
      %14 = sbr.rel (0) target = $region5
    $region4: #{tpu_custom_call.1} parent=1 // pred_region
      %16 = vsyncadd [#allocation3], 0
      %s18 = sshll.u32 %s0, 4
      %s19 = int_to_ptr.hbm [resolvable:$true] %s18
      %s20 = sshll.u32 [#allocation2], 4
      %s21 = int_to_ptr.vmem [resolvable:$true] %s20
      %23 = dma.hbm_to_vmem [thread:$0]  %s19, 128, %s21, [#allocation3]
    $region5: #{tpu_custom_call.1} parent=1 // pred_fallthru
      _
    // Predicated region
    $region6: #{tpu_custom_call.1} parent=1 // pred_check
      _
    $region7: #{tpu_custom_call.1} parent=1 // pred_check_branch
      %25 = sbr.rel (0) target = $region9
    $region8: #{tpu_custom_call.1} parent=1 // pred_region
      %s26 = sadd.s32 0, 1
      %s27 = smul.u32 %s26, 2
      %29 = vsyncadd [#allocation6], 0
      %s30 = smul.addr %s27, 4
      %s31 = scalar_lea.hbm %s1, %s30
      %s33 = sshll.u32 %s31, 4
      %s34 = int_to_ptr.hbm [resolvable:$true] %s33
      %s35 = sshll.u32 [#allocation5], 4
      %s36 = int_to_ptr.vmem [resolvable:$true] %s35
      %38 = dma.hbm_to_vmem [thread:$0]  %s34, 64, %s36, [#allocation6]
    $region9: #{tpu_custom_call.1} parent=1 // pred_fallthru
      _
    // Predicated region
    $region10: #{tpu_custom_call.1} parent=1 // pred_check
      _
    $region11: #{tpu_custom_call.1} parent=1 // pred_check_branch
      %40 = sbr.rel (0) target = $region13
    $region12: #{tpu_custom_call.1} parent=1 // pred_region
      %42 = vsyncadd [#allocation6], 0
      %s43 = sshll.u32 %s2, 4
      %s44 = int_to_ptr.hbm [resolvable:$true] %s43
      %s45 = sshll.u32 [#allocation7], 4
      %s46 = int_to_ptr.vmem [resolvable:$true] %s45
      %51 = dma.hbm_to_vmem [thread:$0]  %s44, 2048, %s46, [#allocation6], 64, 64, 4
    $region13: #{tpu_custom_call.1} parent=1 // pred_fallthru
      _
    // Predicated region
    $region14: #{tpu_custom_call.1} parent=1 // pred_check
      _
    $region15: #{tpu_custom_call.1} parent=1 // pred_check_branch
      %53 = sbr.rel (0) target = $region17
    $region16: #{tpu_custom_call.1} parent=1 // pred_region
      %55 = vsyncadd [#allocation9], 0
      %s56 = sshll.u32 %s3, 4
      %s57 = int_to_ptr.hbm [resolvable:$true] %s56
      %s58 = sshll.u32 [#allocation8], 4
      %s59 = int_to_ptr.vmem [resolvable:$true] %s58
      %64 = dma.hbm_to_vmem [thread:$0]  %s57, 1024, %s59, [#allocation9], 64, 64, 4
    $region17: #{tpu_custom_call.1} parent=1 // pred_fallthru
      _
    // Predicated region
    $region18: #{tpu_custom_call.1} parent=1 // pred_check
      _
    $region19: #{tpu_custom_call.1} parent=1 // pred_check_branch
      %66 = sbr.rel (0) target = $region21
    $region20: #{tpu_custom_call.1} parent=1 // pred_region
      %68 = dma.done [#allocation3], 128
    $region21: #{tpu_custom_call.1} parent=1 // pred_fallthru
      _
    // Predicated region
    $region22: #{tpu_custom_call.1} parent=1 // pred_check
      _
    $region23: #{tpu_custom_call.1} parent=1 // pred_check_branch
      %70 = sbr.rel (0) target = $region25
    $region24: #{tpu_custom_call.1} parent=1 // pred_region
      %72 = dma.done [#allocation6], 64
    $region25: #{tpu_custom_call.1} parent=1 // pred_fallthru
      _
    // Predicated region
    $region26: #{tpu_custom_call.1} parent=1 // pred_check
      _
    $region27: #{tpu_custom_call.1} parent=1 // pred_check_branch
      %74 = sbr.rel (0) target = $region29
    $region28: #{tpu_custom_call.1} parent=1 // pred_region
      %76 = dma.done [#allocation6], 2048
    $region29: #{tpu_custom_call.1} parent=1 // pred_fallthru
      _
    // Predicated region
    $region30: #{tpu_custom_call.1} parent=1 // pred_check
      _
    $region31: #{tpu_custom_call.1} parent=1 // pred_check_branch
      %78 = sbr.rel (0) target = $region33
    $region32: #{tpu_custom_call.1} parent=1 // pred_region
      %80 = dma.done [#allocation9], 1024
    $region33: #{tpu_custom_call.1} parent=1 // pred_fallthru
      _
    %s81 = sadd.s32 0, 1
    %s82 = smul.u32 %s81, 2
    %v83 = vld [vmem:[#allocation2] sm:$0xff]
    %v84 = vld [vmem:[#allocation7] sm:$0xf]
    %v85 = vld [vmem:[#allocation7 + $0x4] sm:$0xf]
    %v86 = vld [vmem:[#allocation7 + $0x8] sm:$0xf]
    %v87 = vld [vmem:[#allocation7 + $0xc] sm:$0xf]
    %v88 = vld [vmem:[#allocation7 + $0x10] sm:$0xf]
    %v89 = vld [vmem:[#allocation7 + $0x14] sm:$0xf]
    %v90 = vld [vmem:[#allocation7 + $0x18] sm:$0xf]
    %v91 = vld [vmem:[#allocation7 + $0x1c] sm:$0xf]
    %v92 = vld [vmem:[#allocation7 + $0x20] sm:$0xf]
    %v93 = vld [vmem:[#allocation7 + $0x24] sm:$0xf]
    %v94 = vld [vmem:[#allocation7 + $0x28] sm:$0xf]
    %v95 = vld [vmem:[#allocation7 + $0x2c] sm:$0xf]
    %v96 = vld [vmem:[#allocation7 + $0x30] sm:$0xf]
    %v97 = vld [vmem:[#allocation7 + $0x34] sm:$0xf]
    %v98 = vld [vmem:[#allocation7 + $0x38] sm:$0xf]
    %v99 = vld [vmem:[#allocation7 + $0x3c] sm:$0xf]
    %v100 = vld [vmem:[#allocation7 + $0x40] sm:$0xf]
    %v101 = vld [vmem:[#allocation7 + $0x44] sm:$0xf]
    %v102 = vld [vmem:[#allocation7 + $0x48] sm:$0xf]
    %v103 = vld [vmem:[#allocation7 + $0x4c] sm:$0xf]
    %v104 = vld [vmem:[#allocation7 + $0x50] sm:$0xf]
    %v105 = vld [vmem:[#allocation7 + $0x54] sm:$0xf]
    %v106 = vld [vmem:[#allocation7 + $0x58] sm:$0xf]
    %v107 = vld [vmem:[#allocation7 + $0x5c] sm:$0xf]
    %v108 = vld [vmem:[#allocation7 + $0x60] sm:$0xf]
    %v109 = vld [vmem:[#allocation7 + $0x64] sm:$0xf]
    %v110 = vld [vmem:[#allocation7 + $0x68] sm:$0xf]
    %v111 = vld [vmem:[#allocation7 + $0x6c] sm:$0xf]
    %v112 = vld [vmem:[#allocation7 + $0x70] sm:$0xf]
    %v113 = vld [vmem:[#allocation7 + $0x74] sm:$0xf]
    %v114 = vld [vmem:[#allocation7 + $0x78] sm:$0xf]
    %v115 = vld [vmem:[#allocation7 + $0x7c] sm:$0xf]
    %v116 = vld [vmem:[#allocation5] sm:$0xf]
    %v117 = vld [vmem:[#allocation8] sm:$0xf]
    %v118 = vld [vmem:[#allocation8 + $0x4] sm:$0xf]
    %v119 = vld [vmem:[#allocation8 + $0x8] sm:$0xf]
    %v120 = vld [vmem:[#allocation8 + $0xc] sm:$0xf]
    %v121 = vld [vmem:[#allocation8 + $0x10] sm:$0xf]
    %v122 = vld [vmem:[#allocation8 + $0x14] sm:$0xf]
    %v123 = vld [vmem:[#allocation8 + $0x18] sm:$0xf]
    %v124 = vld [vmem:[#allocation8 + $0x1c] sm:$0xf]
    %v125 = vld [vmem:[#allocation8 + $0x20] sm:$0xf]
    %v126 = vld [vmem:[#allocation8 + $0x24] sm:$0xf]
    %v127 = vld [vmem:[#allocation8 + $0x28] sm:$0xf]
    %v128 = vld [vmem:[#allocation8 + $0x2c] sm:$0xf]
    %v129 = vld [vmem:[#allocation8 + $0x30] sm:$0xf]
    %v130 = vld [vmem:[#allocation8 + $0x34] sm:$0xf]
    %v131 = vld [vmem:[#allocation8 + $0x38] sm:$0xf]
    %v132 = vld [vmem:[#allocation8 + $0x3c] sm:$0xf]
    %v149 = vunpack.c.l.b16 %v117
    %v150 = vunpack.c.l.b16 %v118
    %v151 = vunpack.c.l.b16 %v119
    %v152 = vunpack.c.l.b16 %v120
    %v153 = vunpack.c.l.b16 %v121
    %v154 = vunpack.c.l.b16 %v122
    %v155 = vunpack.c.l.b16 %v123
    %v156 = vunpack.c.l.b16 %v124
    %v157 = vunpack.c.l.b16 %v125
    %v158 = vunpack.c.l.b16 %v126
    %v159 = vunpack.c.l.b16 %v127
    %v160 = vunpack.c.l.b16 %v128
    %v161 = vunpack.c.l.b16 %v129
    %v162 = vunpack.c.l.b16 %v130
    %v163 = vunpack.c.l.b16 %v131
    %v164 = vunpack.c.l.b16 %v132
    %v165 = vpack.c.b16 %v150, %v149
    %v166 = vpack.c.b16 %v152, %v151
    %v167 = vpack.c.b16 %v154, %v153
    %v168 = vpack.c.b16 %v156, %v155
    %v169 = vpack.c.b16 %v158, %v157
    %v170 = vpack.c.b16 %v160, %v159
    %v171 = vpack.c.b16 %v162, %v161
    %v172 = vpack.c.b16 %v164, %v163
    %181 = vmatpush.bf16.msra.mxu0 %v172
    %182 = vmatpush.bf16.msra.mxu0 %v171
    %183 = vmatpush.bf16.msra.mxu0 %v170
    %184 = vmatpush.bf16.msra.mxu0 %v169
    %185 = vmatpush.bf16.msra.mxu0 %v168
    %186 = vmatpush.bf16.msra.mxu0 %v167
    %187 = vmatpush.bf16.msra.mxu0 %v166
    %188 = vmatpush.bf16.msra.mxu0 %v165
    %189 = vmatmul.bf16.gmra.mxu0 %v116
    %v190 = vpop.f32.mrf.mxu0
    %v191 = vadd.f32 0.0, %v190
    %v192 = vpop.f32.mrf.mxu0
    %193 = vdwg.mxu0
    %v195 = vunpack.c.l.b16 %v83
    %v196 = vunpack.c.h.b16 %v83
    %v197 = vpack.c.b16 %v195, %v195
    %v198 = vpack.c.b16 %v196, %v196
    %v233 = vunpack.c.l.b16 %v84
    %v234 = vunpack.c.l.b16 %v85
    %v235 = vunpack.c.l.b16 %v86
    %v236 = vunpack.c.l.b16 %v87
    %v237 = vunpack.c.l.b16 %v88
    %v238 = vunpack.c.l.b16 %v89
    %v239 = vunpack.c.l.b16 %v90
    %v240 = vunpack.c.l.b16 %v91
    %v241 = vunpack.c.l.b16 %v92
    %v242 = vunpack.c.l.b16 %v93
    %v243 = vunpack.c.l.b16 %v94
    %v244 = vunpack.c.l.b16 %v95
    %v245 = vunpack.c.l.b16 %v96
    %v246 = vunpack.c.l.b16 %v97
    %v247 = vunpack.c.l.b16 %v98
    %v248 = vunpack.c.l.b16 %v99
    %v249 = vunpack.c.l.b16 %v100
    %v250 = vunpack.c.l.b16 %v101
    %v251 = vunpack.c.l.b16 %v102
    %v252 = vunpack.c.l.b16 %v103
    %v253 = vunpack.c.l.b16 %v104
    %v254 = vunpack.c.l.b16 %v105
    %v255 = vunpack.c.l.b16 %v106
    %v256 = vunpack.c.l.b16 %v107
    %v257 = vunpack.c.l.b16 %v108
    %v258 = vunpack.c.l.b16 %v109
    %v259 = vunpack.c.l.b16 %v110
    %v260 = vunpack.c.l.b16 %v111
    %v261 = vunpack.c.l.b16 %v112
    %v262 = vunpack.c.l.b16 %v113
    %v263 = vunpack.c.l.b16 %v114
    %v264 = vunpack.c.l.b16 %v115
    %v265 = vpack.c.b16 %v234, %v233
    %v266 = vpack.c.b16 %v236, %v235
    %v267 = vpack.c.b16 %v238, %v237
    %v268 = vpack.c.b16 %v240, %v239
    %v269 = vpack.c.b16 %v242, %v241
    %v270 = vpack.c.b16 %v244, %v243
    %v271 = vpack.c.b16 %v246, %v245
    %v272 = vpack.c.b16 %v248, %v247
    %v273 = vpack.c.b16 %v250, %v249
    %v274 = vpack.c.b16 %v252, %v251
    %v275 = vpack.c.b16 %v254, %v253
    %v276 = vpack.c.b16 %v256, %v255
    %v277 = vpack.c.b16 %v258, %v257
    %v278 = vpack.c.b16 %v260, %v259
    %v279 = vpack.c.b16 %v262, %v261
    %v280 = vpack.c.b16 %v264, %v263
    %297 = vmatpush.bf16.msra.mxu0 %v272
    %298 = vmatpush.bf16.msra.mxu0 %v271
    %299 = vmatpush.bf16.msra.mxu0 %v270
    %300 = vmatpush.bf16.msra.mxu0 %v269
    %301 = vmatpush.bf16.msra.mxu0 %v268
    %302 = vmatpush.bf16.msra.mxu0 %v267
    %303 = vmatpush.bf16.msra.mxu0 %v266
    %304 = vmatpush.bf16.msra.mxu0 %v265
    %305 = vmatmul.bf16.gmra.mxu0 %v197
    %v306 = vpop.f32.mrf.mxu0
    %v307 = vadd.f32 %v191, %v306
    %v308 = vpop.f32.mrf.mxu0
    %309 = vdwg.mxu0
    %310 = vmatpush.bf16.msra.mxu0 %v280
    %311 = vmatpush.bf16.msra.mxu0 %v279
    %312 = vmatpush.bf16.msra.mxu0 %v278
    %313 = vmatpush.bf16.msra.mxu0 %v277
    %314 = vmatpush.bf16.msra.mxu0 %v276
    %315 = vmatpush.bf16.msra.mxu0 %v275
    %316 = vmatpush.bf16.msra.mxu0 %v274
    %317 = vmatpush.bf16.msra.mxu0 %v273
    %318 = vmatmul.bf16.gmra.mxu0 %v198
    %v319 = vpop.f32.mrf.mxu0
    %v320 = vadd.f32 %v307, %v319
    %v321 = vpop.f32.mrf.mxu0
    %322 = vdwg.mxu0
    %323 = vst [vmem:[#allocation10] sm:$0xff] %v320
    // Predicated region
    $region34: #{tpu_custom_call.1} parent=1 // pred_check
      _
    $region35: #{tpu_custom_call.1} parent=1 // pred_check_branch
      %325 = sbr.rel (0) target = $region37
    $region36: #{tpu_custom_call.1} parent=1 // pred_region
      %327 = vsyncadd [#allocation4], 0
      %s329 = sshll.u32 [#allocation10], 4
      %s330 = int_to_ptr.vmem [resolvable:$true] %s329
      %s331 = sshll.u32 %s4, 4
      %s332 = int_to_ptr.hbm [resolvable:$true] %s331
      %334 = dma.vmem_to_hbm [thread:$0]  %s330, 128, %s332, [#allocation4]
    $region37: #{tpu_custom_call.1} parent=1 // pred_fallthru
      _
    // Predicated region
    $region38: #{tpu_custom_call.1} parent=1 // pred_check
      _
    $region39: #{tpu_custom_call.1} parent=1 // pred_check_branch
      %336 = sbr.rel (0) target = $region41
    $region40: #{tpu_custom_call.1} parent=1 // pred_region
      %338 = dma.done [#allocation4], 128
    $region41: #{tpu_custom_call.1} parent=1 // pred_fallthru
      _
    %339 = vsyncpa [#allocation3], 1
    %340 = vsyncpa [#allocation6], 1
    %341 = vsyncpa [#allocation9], 1
    %342 = vsyncpa [#allocation4], 1

</llo_original>
